<compile_context>
chip_gen: v6e
topology: v6e:2x2x1
jax: 0.10.0
libtpu: 0.0.40
codegen_flags: <defaults>
</compile_context>

<pallas_src>
import functools

import jax
import jax.numpy as jnp
from jax.experimental import pallas as pl
from jax.experimental.pallas import tpu as pltpu


def _prenet_kernel(x_ref, w1_ref, b1_ref, w2_ref, b2_ref, o_ref, *, mxu_dtype):
    # x_ref:  (TM, Dinp)   w1_ref: (Dinp, Hp)   b1_ref: (1, Hp)
    # w2_ref: (Hp, Doutp)  b2_ref: (1, Doutp)   o_ref:  (TM, Doutp)
    x = x_ref[...].astype(mxu_dtype)
    h = jnp.dot(x, w1_ref[...].astype(mxu_dtype),
                preferred_element_type=jnp.float32)
    h = jnp.maximum(h + b1_ref[...], 0.0)          # bias + relu1 in f32
    # dropout1: identity (eval mode)
    y = jnp.dot(h.astype(mxu_dtype), w2_ref[...].astype(mxu_dtype),
                preferred_element_type=jnp.float32)
    y = jnp.maximum(y + b2_ref[...], 0.0)          # bias + relu2 in f32
    # dropout2: identity (eval mode)
    o_ref[...] = y.astype(o_ref.dtype)


def _round_up(x, m):
    return ((x + m - 1) // m) * m


def _pick_row_tile(m, dinp, hp, doutp, w_itemsize, requested,
                   budget_bytes=24 * 1024 * 1024):
    """Largest row tile <= requested that fits a conservative VMEM budget.

    Budget counts double-buffered x/out tiles, the f32 intermediate, and the
    resident (double-buffered) weights/biases; 24 MiB leaves headroom under
    the 32 MiB default scoped limit (and v7x's 64 MiB physical VMEM).
    """
    tm = max(8, min(_round_up(requested, 8), _round_up(m, 8)))
    while tm > 8:
        est = (2 * tm * dinp * 4           # x tiles (f32, double-buffered)
               + 2 * tm * doutp * 4        # out tiles (f32, double-buffered)
               + tm * hp * 4               # f32 intermediate
               + 2 * (dinp * hp + hp * doutp) * w_itemsize   # weights
               + 2 * (hp + doutp) * 4)     # biases
        if est <= budget_bytes:
            break
        tm = max(8, _round_up(tm // 2, 8))
    return tm


def prenet_forward(x, w1, b1, w2, b2, *, block_rows=512,
                   mxu_dtype=jnp.bfloat16):
    """x: [B, T, D_in] float32 -> [B, T, D_out] float32.

    w1: [D_in, H], b1: [1, H], w2: [H, D_out], b2: [1, D_out] (all float32).
    """
    B, T, D_in = x.shape
    H = w1.shape[1]
    D_out = w2.shape[1]
    M = B * T

    # ---- pad feature dims to multiples of 128 (lane-dense, full MXU K/N) ----
    Dinp = _round_up(D_in, 128)
    Hp = _round_up(H, 128)
    Doutp = _round_up(D_out, 128)

    w_dtype = mxu_dtype
    w1p = jnp.zeros((Dinp, Hp), w_dtype).at[:D_in, :H].set(w1.astype(w_dtype))
    w2p = jnp.zeros((Hp, Doutp), w_dtype).at[:H, :D_out].set(w2.astype(w_dtype))
    b1p = jnp.zeros((1, Hp), jnp.float32).at[:, :H].set(b1)
    b2p = jnp.zeros((1, Doutp), jnp.float32).at[:, :D_out].set(b2)

    # ---- pick row tile and pad rows to a multiple of it ---------------------
    TM = _pick_row_tile(M, Dinp, Hp, Doutp, jnp.dtype(w_dtype).itemsize,
                        block_rows)
    Mp = _round_up(M, TM)
    x2 = x.reshape(M, D_in)
    x2p = jnp.zeros((Mp, Dinp), x.dtype).at[:M, :D_in].set(x2)

    grid = (pl.cdiv(Mp, TM),)

    cost = pl.CostEstimate(
        flops=2 * M * (D_in * H + H * D_out),
        transcendentals=0,
        bytes_accessed=(x2p.size * x2p.dtype.itemsize
                        + Mp * Doutp * 4
                        + w1p.size * w1p.dtype.itemsize
                        + w2p.size * w2p.dtype.itemsize
                        + (Hp + Doutp) * 4),
    )

    out2p = pl.pallas_call(
        functools.partial(_prenet_kernel, mxu_dtype=mxu_dtype),
        out_shape=jax.ShapeDtypeStruct((Mp, Doutp), x.dtype),
        grid_spec=pltpu.PrefetchScalarGridSpec(
            num_scalar_prefetch=0,
            grid=grid,
            in_specs=[
                pl.BlockSpec((TM, Dinp), lambda i: (i, 0)),     # x tile
                pl.BlockSpec((Dinp, Hp), lambda i: (0, 0)),     # W1 (resident)
                pl.BlockSpec((1, Hp), lambda i: (0, 0)),        # b1
                pl.BlockSpec((Hp, Doutp), lambda i: (0, 0)),    # W2 (resident)
                pl.BlockSpec((1, Doutp), lambda i: (0, 0)),     # b2
            ],
            out_specs=pl.BlockSpec((TM, Doutp), lambda i: (i, 0)),
        ),
        compiler_params=pltpu.CompilerParams(
            dimension_semantics=("parallel",)),
        cost_estimate=cost,
    )(x2p, w1p, b1p, w2p, b2p)

    return out2p[:M, :D_out].reshape(B, T, D_out)


def init_prenet_params(key, input_size, hidden_size, output_size):
    """Deterministic Xavier-uniform weights (gain=1.0 for 'linear') + small bias."""
    k1, k2, k3, k4 = jax.random.split(key, 4)

    def xavier_uniform(k, fan_in, fan_out):
        limit = (6.0 / (fan_in + fan_out)) ** 0.5
        # Stored as [in, out] so the kernel computes x @ W (== x @ W_torch.T).
        return jax.random.uniform(k, (fan_in, fan_out), jnp.float32,
                                  minval=-limit, maxval=limit)

    def bias_init(k, fan_in, fan_out):
        bound = 1.0 / (fan_in ** 0.5)
        return jax.random.uniform(k, (1, fan_out), jnp.float32,
                                  minval=-bound, maxval=bound)

    w1 = xavier_uniform(k1, input_size, hidden_size)
    b1 = bias_init(k2, input_size, hidden_size)
    w2 = xavier_uniform(k3, hidden_size, output_size)
    b2 = bias_init(k4, hidden_size, output_size)
    return w1, b1, w2, b2


def prenet_ref(x, w1, b1, w2, b2):
    h = jnp.maximum(x @ w1 + b1[0], 0.0)
    return jnp.maximum(h @ w2 + b2[0], 0.0)


if __name__ == "__main__":
    key = jax.random.PRNGKey(0)
    kx, kp, kx2, kp2 = jax.random.split(key, 4)

    # --- small demo shape (matches module defaults-ish) ----------------------
    B, T = 2, 8
    input_size, hidden_size, output_size = 32, 64, 32

    x = jax.random.normal(kx, (B, T, input_size), jnp.float32)
    w1, b1, w2, b2 = init_prenet_params(kp, input_size, hidden_size, output_size)

    ref = prenet_ref(x.reshape(-1, input_size), w1, b1, w2, b2)
    ref = ref.reshape(B, T, output_size)

    # f32 MXU path: tight tolerance.
    out_f32 = prenet_forward(x, w1, b1, w2, b2, mxu_dtype=jnp.float32)
    out_f32 = jax.block_until_ready(out_f32)
    assert out_f32.shape == (B, T, output_size)
    assert jnp.allclose(out_f32, ref, atol=1e-5, rtol=1e-5), "f32 mismatch"

    # bf16 MXU path (default): looser tolerance due to bf16 operands.
    out_bf16 = prenet_forward(x, w1, b1, w2, b2)
    out_bf16 = jax.block_until_ready(out_bf16)
    assert jnp.allclose(out_bf16, ref, atol=5e-2, rtol=5e-2), "bf16 mismatch"

    # --- larger, non-aligned shape: exercises row tiling + feature padding ---
    B2, T2 = 4, 300                      # M = 1200, not a multiple of the tile
    in2, hid2, out2 = 80, 200, 80        # none are multiples of 128
    xl = jax.random.normal(kx2, (B2, T2, in2), jnp.float32)
    wl1, bl1, wl2, bl2 = init_prenet_params(kp2, in2, hid2, out2)

    out_l = prenet_forward(xl, wl1, bl1, wl2, bl2,
                           block_rows=256, mxu_dtype=jnp.float32)
    out_l = jax.block_until_ready(out_l)
    ref_l = prenet_ref(xl.reshape(-1, in2), wl1, bl1, wl2, bl2)
    ref_l = ref_l.reshape(B2, T2, out2)
    assert out_l.shape == (B2, T2, out2)
    assert jnp.allclose(out_l, ref_l, atol=1e-3, rtol=1e-3), "tiled mismatch"

    print("KERNEL_OK")
</pallas_src>

<mosaic_0001>
module attributes {stable_mosaic.version = 11 : i64} {
  func.func @_prenet_kernel(%arg0: i32, %arg1: memref<16x128xf32, #tpu.memory_space<vmem>>, %arg2: memref<128x128xf32, #tpu.memory_space<vmem>>, %arg3: memref<1x128xf32, #tpu.memory_space<vmem>>, %arg4: memref<128x128xf32, #tpu.memory_space<vmem>>, %arg5: memref<1x128xf32, #tpu.memory_space<vmem>>, %arg6: memref<16x128xf32, #tpu.memory_space<vmem>>) attributes {dimension_semantics = [#tpu.dimension_semantics<parallel>], iteration_bounds = array<i64: 1>, scalar_prefetch = 0 : i64, scratch_operands = 0 : i64, tpu.core_type = #tpu.core_type<tc>, window_params = [{transform_indices = @transform_0, window_bounds = array<i64: 16, 128>}, {pipeline_mode = #tpu.pipeline_mode<synchronous>, transform_indices = @transform_1, window_bounds = array<i64: 128, 128>}, {pipeline_mode = #tpu.pipeline_mode<synchronous>, transform_indices = @transform_2, window_bounds = array<i64: 1, 128>}, {pipeline_mode = #tpu.pipeline_mode<synchronous>, transform_indices = @transform_3, window_bounds = array<i64: 128, 128>}, {pipeline_mode = #tpu.pipeline_mode<synchronous>, transform_indices = @transform_4, window_bounds = array<i64: 1, 128>}, {transform_indices = @transform_5, window_bounds = array<i64: 16, 128>}]} {
    %c0 = arith.constant 0 : index
    %c0_0 = arith.constant 0 : index
    %0 = vector.load %arg1[%c0, %c0_0] : memref<16x128xf32, #tpu.memory_space<vmem>>, vector<16x128xf32>
    %c0_1 = arith.constant 0 : index
    %c0_2 = arith.constant 0 : index
    %1 = vector.load %arg2[%c0_1, %c0_2] : memref<128x128xf32, #tpu.memory_space<vmem>>, vector<128x128xf32>
    %cst = arith.constant dense<0.000000e+00> : vector<16x128xf32>
    %2 = tpu.matmul %0, %1, %cst {dimension_numbers = #tpu.dot_dimension_numbers<[1], [0], [0], [1], [0, 0, 1, 1], [], []>} : vector<16x128xf32>, vector<128x128xf32>, vector<16x128xf32> -> vector<16x128xf32>
    %c0_3 = arith.constant 0 : index
    %c0_4 = arith.constant 0 : index
    %3 = vector.load %arg3[%c0_3, %c0_4] : memref<1x128xf32, #tpu.memory_space<vmem>>, vector<1x128xf32>
    %4 = vector.broadcast %3 : vector<1x128xf32> to vector<16x128xf32>
    %5 = arith.addf %2, %4 : vector<16x128xf32>
    %cst_5 = arith.constant 0.000000e+00 : f32
    %6 = vector.broadcast %cst_5 : f32 to vector<16x128xf32>
    %7 = arith.maximumf %5, %6 : vector<16x128xf32>
    %c0_6 = arith.constant 0 : index
    %c0_7 = arith.constant 0 : index
    %8 = vector.load %arg4[%c0_6, %c0_7] : memref<128x128xf32, #tpu.memory_space<vmem>>, vector<128x128xf32>
    %cst_8 = arith.constant dense<0.000000e+00> : vector<16x128xf32>
    %9 = tpu.matmul %7, %8, %cst_8 {dimension_numbers = #tpu.dot_dimension_numbers<[1], [0], [0], [1], [0, 0, 1, 1], [], []>} : vector<16x128xf32>, vector<128x128xf32>, vector<16x128xf32> -> vector<16x128xf32>
    %c0_9 = arith.constant 0 : index
    %c0_10 = arith.constant 0 : index
    %10 = vector.load %arg5[%c0_9, %c0_10] : memref<1x128xf32, #tpu.memory_space<vmem>>, vector<1x128xf32>
    %11 = vector.broadcast %10 : vector<1x128xf32> to vector<16x128xf32>
    %12 = arith.addf %9, %11 : vector<16x128xf32>
    %cst_11 = arith.constant 0.000000e+00 : f32
    %13 = vector.broadcast %cst_11 : f32 to vector<16x128xf32>
    %14 = arith.maximumf %12, %13 : vector<16x128xf32>
    %c0_12 = arith.constant 0 : index
    %c0_13 = arith.constant 0 : index
    %15 = vector.load %arg6[%c0_12, %c0_13] : memref<16x128xf32, #tpu.memory_space<vmem>>, vector<16x128xf32>
    tpu.vector_store %arg6[%c0_12, %c0_13], %14 {strides = array<i32>} : memref<16x128xf32, #tpu.memory_space<vmem>>, vector<16x128xf32>,
    return
  }
  func.func @transform_0(%arg0: i32) -> (i32, i32) {
    %c0_i32 = arith.constant 0 : i32
    %c0_i32_0 = arith.constant 0 : i32
    return %arg0, %c0_i32 : i32, i32
  }
  func.func @transform_1(%arg0: i32) -> (i32, i32) {
    %c0_i32 = arith.constant 0 : i32
    %c0_i32_0 = arith.constant 0 : i32
    %c0_i32_1 = arith.constant 0 : i32
    return %c0_i32, %c0_i32_0 : i32, i32
  }
  func.func @transform_2(%arg0: i32) -> (i32, i32) {
    %c0_i32 = arith.constant 0 : i32
    %c0_i32_0 = arith.constant 0 : i32
    %c0_i32_1 = arith.constant 0 : i32
    return %c0_i32, %c0_i32_0 : i32, i32
  }
  func.func @transform_3(%arg0: i32) -> (i32, i32) {
    %c0_i32 = arith.constant 0 : i32
    %c0_i32_0 = arith.constant 0 : i32
    %c0_i32_1 = arith.constant 0 : i32
    return %c0_i32, %c0_i32_0 : i32, i32
  }
  func.func @transform_4(%arg0: i32) -> (i32, i32) {
    %c0_i32 = arith.constant 0 : i32
    %c0_i32_0 = arith.constant 0 : i32
    %c0_i32_1 = arith.constant 0 : i32
    return %c0_i32, %c0_i32_0 : i32, i32
  }
  func.func @transform_5(%arg0: i32) -> (i32, i32) {
    %c0_i32 = arith.constant 0 : i32
    %c0_i32_0 = arith.constant 0 : i32
    return %arg0, %c0_i32 : i32, i32
  }
}

</mosaic_0001>

<llo_original>
// kernel: tpu_custom_call.1
$region0: #{tpu_custom_call.1}
  #allocation0 [shape = 'u32[]', space=smem, size = 0x4, offset = 0x4, fixed_abs, tag = 'smem constant byte address 0x4 - core index']
  #allocation1 [shape = 'u32[144,128]{1,0:T(1,128)}', space=vmem, size = 0x12000, scoped, tag = 'internal scratch']
  %s0 = inlined_call_operand.hbm [shape: f32[16,128], index: 0, kind: input, shape index: {}]
  %s1 = inlined_call_operand.hbm [shape: f32[128,128], index: 1, kind: input, shape index: {}]
  %s2 = inlined_call_operand.vmem [shape: f32[1,128], index: 2, kind: input, shape index: {}]
  %s3 = inlined_call_operand.hbm [shape: f32[128,128], index: 3, kind: input, shape index: {}]
  %s4 = inlined_call_operand.vmem [shape: f32[1,128], index: 4, kind: input, shape index: {}]
  %s5 = inlined_call_operand.hbm [shape: f32[16,128], index: 5, kind: output, shape index: {}]
  %s6 = sld [smem:[#allocation0]]
  $region42: #{tpu_custom_call.1} parent=0
    _
  %s8 = ssub.s32 1, %s6
  %s9 = scalar_select 0, %s8, %s6
  $region1: #{tpu_custom_call.1} parent=0
    #allocation2 [shape = 'u8[8192]{0}', space=vmem, size = 0x2000, scoped, tag = 'input window, operand 0, single buffered']
    #allocation3 [shape = 's32[1]{0}', space=sflag, size = 0x4, scoped, tag = 'scoped memory for tpu_custom_call.1']
    #allocation4 [shape = 's32[1]{0}', space=sflag, size = 0x4, scoped, tag = 'scoped memory for tpu_custom_call.1']
    #allocation5 [shape = 'u8[65536]{0}', space=vmem, size = 0x10000, scoped, tag = 'input window, operand 1, single buffered']
    #allocation6 [shape = 's32[1]{0}', space=sflag, size = 0x4, scoped, tag = 'scoped memory for tpu_custom_call.1']
    #allocation7 [shape = 'u8[65536]{0}', space=vmem, size = 0x10000, scoped, tag = 'input window, operand 3, single buffered']
    #allocation8 [shape = 'u8[8192]{0}', space=vmem, size = 0x2000, scoped, tag = 'output window, operand 0, single buffered']
    %10 = vsyncpa [#allocation3], 0
    %11 = vsyncpa [#allocation6], 0
    %12 = vsyncpa [#allocation4], 0
    // Predicated region
    $region2: #{tpu_custom_call.1} parent=1 // pred_check
      _
    $region3: #{tpu_custom_call.1} parent=1 // pred_check_branch
      %14 = sbr.rel (0) target = $region5
    $region4: #{tpu_custom_call.1} parent=1 // pred_region
      %s16 = ssub.s32 256, 256
      %17 = vsyncadd [#allocation3], %s16
      %s18 = sshll.u32 [#allocation2], 4
      %s19 = int_to_ptr.vmem [resolvable:$true] %s18
      %24 = dma.hbm_to_vmem [thread:$0]  %s0, 256, %s19, [#allocation3], 128, 128, 8
    $region5: #{tpu_custom_call.1} parent=1 // pred_fallthru
      _
    // Predicated region
    $region6: #{tpu_custom_call.1} parent=1 // pred_check
      _
    $region7: #{tpu_custom_call.1} parent=1 // pred_check_branch
      %26 = sbr.rel (0) target = $region9
    $region8: #{tpu_custom_call.1} parent=1 // pred_region
      %s28 = ssub.s32 2048, 2048
      %29 = vsyncadd [#allocation6], %s28
      %s30 = sshll.u32 [#allocation5], 4
      %s31 = int_to_ptr.vmem [resolvable:$true] %s30
      %36 = dma.hbm_to_vmem [thread:$0]  %s1, 2048, %s31, [#allocation6], 128, 128, 8
    $region9: #{tpu_custom_call.1} parent=1 // pred_fallthru
      _
    // Predicated region
    $region10: #{tpu_custom_call.1} parent=1 // pred_check
      _
    $region11: #{tpu_custom_call.1} parent=1 // pred_check_branch
      %38 = sbr.rel (0) target = $region13
    $region12: #{tpu_custom_call.1} parent=1 // pred_region
      _
    $region13: #{tpu_custom_call.1} parent=1 // pred_fallthru
      _
    // Predicated region
    $region14: #{tpu_custom_call.1} parent=1 // pred_check
      _
    $region15: #{tpu_custom_call.1} parent=1 // pred_check_branch
      %40 = sbr.rel (0) target = $region17
    $region16: #{tpu_custom_call.1} parent=1 // pred_region
      %s42 = ssub.s32 2048, 2048
      %43 = vsyncadd [#allocation6], %s42
      %s44 = sshll.u32 [#allocation7], 4
      %s45 = int_to_ptr.vmem [resolvable:$true] %s44
      %50 = dma.hbm_to_vmem [thread:$0]  %s3, 2048, %s45, [#allocation6], 128, 128, 8
    $region17: #{tpu_custom_call.1} parent=1 // pred_fallthru
      _
    // Predicated region
    $region18: #{tpu_custom_call.1} parent=1 // pred_check
      _
    $region19: #{tpu_custom_call.1} parent=1 // pred_check_branch
      %52 = sbr.rel (0) target = $region21
    $region20: #{tpu_custom_call.1} parent=1 // pred_region
      _
    $region21: #{tpu_custom_call.1} parent=1 // pred_fallthru
      _
    // Predicated region
    $region22: #{tpu_custom_call.1} parent=1 // pred_check
      _
    $region23: #{tpu_custom_call.1} parent=1 // pred_check_branch
      %54 = sbr.rel (0) target = $region25
    $region24: #{tpu_custom_call.1} parent=1 // pred_region
      %55 = dma.done [#allocation3], 256
    $region25: #{tpu_custom_call.1} parent=1 // pred_fallthru
      _
    // Predicated region
    $region26: #{tpu_custom_call.1} parent=1 // pred_check
      _
    $region27: #{tpu_custom_call.1} parent=1 // pred_check_branch
      %57 = sbr.rel (0) target = $region29
    $region28: #{tpu_custom_call.1} parent=1 // pred_region
      %58 = dma.done [#allocation6], 2048
    $region29: #{tpu_custom_call.1} parent=1 // pred_fallthru
      _
    // Predicated region
    $region30: #{tpu_custom_call.1} parent=1 // pred_check
      _
    $region31: #{tpu_custom_call.1} parent=1 // pred_check_branch
      %60 = sbr.rel (0) target = $region33
    $region32: #{tpu_custom_call.1} parent=1 // pred_region
      %61 = dma.done [#allocation6], 2048
    $region33: #{tpu_custom_call.1} parent=1 // pred_fallthru
      _
    %v62 = vld [vmem:[#allocation2] sm:$0xff]
    %v63 = vld [vmem:[#allocation2 + $0x8] sm:$0xff]
    %v64 = vld [vmem:[#allocation5] sm:$0xff]
    %v65 = vld [vmem:[#allocation5 + $0x8] sm:$0xff]
    %v66 = vld [vmem:[#allocation5 + $0x10] sm:$0xff]
    %v67 = vld [vmem:[#allocation5 + $0x18] sm:$0xff]
    %v68 = vld [vmem:[#allocation5 + $0x20] sm:$0xff]
    %v69 = vld [vmem:[#allocation5 + $0x28] sm:$0xff]
    %v70 = vld [vmem:[#allocation5 + $0x30] sm:$0xff]
    %v71 = vld [vmem:[#allocation5 + $0x38] sm:$0xff]
    %v72 = vld [vmem:[#allocation5 + $0x40] sm:$0xff]
    %v73 = vld [vmem:[#allocation5 + $0x48] sm:$0xff]
    %v74 = vld [vmem:[#allocation5 + $0x50] sm:$0xff]
    %v75 = vld [vmem:[#allocation5 + $0x58] sm:$0xff]
    %v76 = vld [vmem:[#allocation5 + $0x60] sm:$0xff]
    %v77 = vld [vmem:[#allocation5 + $0x68] sm:$0xff]
    %v78 = vld [vmem:[#allocation5 + $0x70] sm:$0xff]
    %v79 = vld [vmem:[#allocation5 + $0x78] sm:$0xff]
    %v80 = vld [vmem:[%s2] sm:$0x1]
    %v82 = vlaneseq
    %v83 = vshrl.u32 %v82, 7
    %v84 = vsub.s32 0, %v83
    %v85 = vrot.slane %v80, %v84
    %87 = vmatprep.subr.mxu0 0.0
    %88 = vmatpush1.msra.mxu0 %v79
    %89 = vmatprep.subr.mxu0 0.0
    %90 = vmatpush1.msra.mxu0 %v78
    %91 = vmatprep.subr.mxu0 0.0
    %92 = vmatpush1.msra.mxu0 %v77
    %93 = vmatprep.subr.mxu0 0.0
    %94 = vmatpush1.msra.mxu0 %v76
    %95 = vmatprep.subr.mxu0 0.0
    %96 = vmatpush1.msra.mxu0 %v75
    %97 = vmatprep.subr.mxu0 0.0
    %98 = vmatpush1.msra.mxu0 %v74
    %99 = vmatprep.subr.mxu0 0.0
    %100 = vmatpush1.msra.mxu0 %v73
    %101 = vmatprep.subr.mxu0 0.0
    %102 = vmatpush1.msra.mxu0 %v72
    %103 = vmatprep.subr.mxu0 0.0
    %104 = vmatpush1.msra.mxu0 %v71
    %105 = vmatprep.subr.mxu0 0.0
    %106 = vmatpush1.msra.mxu0 %v70
    %107 = vmatprep.subr.mxu0 0.0
    %108 = vmatpush1.msra.mxu0 %v69
    %109 = vmatprep.subr.mxu0 0.0
    %110 = vmatpush1.msra.mxu0 %v68
    %111 = vmatprep.subr.mxu0 0.0
    %112 = vmatpush1.msra.mxu0 %v67
    %113 = vmatprep.subr.mxu0 0.0
    %114 = vmatpush1.msra.mxu0 %v66
    %115 = vmatprep.subr.mxu0 0.0
    %116 = vmatpush1.msra.mxu0 %v65
    %117 = vmatprep.subr.mxu0 0.0
    %118 = vmatpush1.msra.mxu0 %v64
    %119 = vmatprep.subr.mxu0 0.0
    %120 = vmatpush2.msra.mxu0 0.0
    %121 = vmatprep.subr.mxu0 0.0
    %122 = vmatpush2.msra.mxu0 0.0
    %123 = vmatprep.subr.mxu0 0.0
    %124 = vmatpush2.msra.mxu0 0.0
    %125 = vmatprep.subr.mxu0 0.0
    %126 = vmatpush2.msra.mxu0 0.0
    %127 = vmatprep.subr.mxu0 0.0
    %128 = vmatpush2.msra.mxu0 0.0
    %129 = vmatprep.subr.mxu0 0.0
    %130 = vmatpush2.msra.mxu0 0.0
    %131 = vmatprep.subr.mxu0 0.0
    %132 = vmatpush2.msra.mxu0 0.0
    %133 = vmatprep.subr.mxu0 0.0
    %134 = vmatpush2.msra.mxu0 0.0
    %135 = vmatprep.subr.mxu0 0.0
    %136 = vmatpush2.msra.mxu0 0.0
    %137 = vmatprep.subr.mxu0 0.0
    %138 = vmatpush2.msra.mxu0 0.0
    %139 = vmatprep.subr.mxu0 0.0
    %140 = vmatpush2.msra.mxu0 0.0
    %141 = vmatprep.subr.mxu0 0.0
    %142 = vmatpush2.msra.mxu0 0.0
    %143 = vmatprep.subr.mxu0 0.0
    %144 = vmatpush2.msra.mxu0 0.0
    %145 = vmatprep.subr.mxu0 0.0
    %146 = vmatpush2.msra.mxu0 0.0
    %147 = vmatprep.subr.mxu0 0.0
    %148 = vmatpush2.msra.mxu0 0.0
    %149 = vmatprep.subr.mxu0 0.0
    %150 = vmatpush2.msra.mxu0 0.0
    %151 = vmatprep.mubr.f32.mxu0 0.0
    %152 = vmatmul.mubr.f32.gmra.mxu0 %v62
    %v153 = vpop.f32.mrf.mxu0
    %v154 = vadd.f32 %v85, %v153
    %v155 = vpop.f32.mrf.mxu0
    %156 = vmatprep.mubr.f32.mxu0 0.0
    %157 = vmatmul.mubr.f32.gmra.mxu0 %v63
    %v158 = vpop.f32.mrf.mxu0
    %v159 = vadd.f32 %v85, %v158
    %v160 = vpop.f32.mrf.mxu0
    %161 = vdwg.mxu0
    %v162 = vmax.f32 %v154, 0.0
    %v163 = vmax.f32 %v159, 0.0
    %v164 = vld [vmem:[#allocation7] sm:$0xff]
    %v165 = vld [vmem:[#allocation7 + $0x8] sm:$0xff]
    %v166 = vld [vmem:[#allocation7 + $0x10] sm:$0xff]
    %v167 = vld [vmem:[#allocation7 + $0x18] sm:$0xff]
    %v168 = vld [vmem:[#allocation7 + $0x20] sm:$0xff]
    %v169 = vld [vmem:[#allocation7 + $0x28] sm:$0xff]
    %v170 = vld [vmem:[#allocation7 + $0x30] sm:$0xff]
    %v171 = vld [vmem:[#allocation7 + $0x38] sm:$0xff]
    %v172 = vld [vmem:[#allocation7 + $0x40] sm:$0xff]
    %v173 = vld [vmem:[#allocation7 + $0x48] sm:$0xff]
    %v174 = vld [vmem:[#allocation7 + $0x50] sm:$0xff]
    %v175 = vld [vmem:[#allocation7 + $0x58] sm:$0xff]
    %v176 = vld [vmem:[#allocation7 + $0x60] sm:$0xff]
    %v177 = vld [vmem:[#allocation7 + $0x68] sm:$0xff]
    %v178 = vld [vmem:[#allocation7 + $0x70] sm:$0xff]
    %v179 = vld [vmem:[#allocation7 + $0x78] sm:$0xff]
    %v180 = vld [vmem:[%s4] sm:$0x1]
    %v182 = vlaneseq
    %v183 = vshrl.u32 %v182, 7
    %v184 = vsub.s32 0, %v183
    %v185 = vrot.slane %v180, %v184
    %187 = vmatprep.subr.mxu0 0.0
    %188 = vmatpush1.msra.mxu0 %v179
    %189 = vmatprep.subr.mxu0 0.0
    %190 = vmatpush1.msra.mxu0 %v178
    %191 = vmatprep.subr.mxu0 0.0
    %192 = vmatpush1.msra.mxu0 %v177
    %193 = vmatprep.subr.mxu0 0.0
    %194 = vmatpush1.msra.mxu0 %v176
    %195 = vmatprep.subr.mxu0 0.0
    %196 = vmatpush1.msra.mxu0 %v175
    %197 = vmatprep.subr.mxu0 0.0
    %198 = vmatpush1.msra.mxu0 %v174
    %199 = vmatprep.subr.mxu0 0.0
    %200 = vmatpush1.msra.mxu0 %v173
    %201 = vmatprep.subr.mxu0 0.0
    %202 = vmatpush1.msra.mxu0 %v172
    %203 = vmatprep.subr.mxu0 0.0
    %204 = vmatpush1.msra.mxu0 %v171
    %205 = vmatprep.subr.mxu0 0.0
    %206 = vmatpush1.msra.mxu0 %v170
    %207 = vmatprep.subr.mxu0 0.0
    %208 = vmatpush1.msra.mxu0 %v169
    %209 = vmatprep.subr.mxu0 0.0
    %210 = vmatpush1.msra.mxu0 %v168
    %211 = vmatprep.subr.mxu0 0.0
    %212 = vmatpush1.msra.mxu0 %v167
    %213 = vmatprep.subr.mxu0 0.0
    %214 = vmatpush1.msra.mxu0 %v166
    %215 = vmatprep.subr.mxu0 0.0
    %216 = vmatpush1.msra.mxu0 %v165
    %217 = vmatprep.subr.mxu0 0.0
    %218 = vmatpush1.msra.mxu0 %v164
    %219 = vmatprep.subr.mxu0 0.0
    %220 = vmatpush2.msra.mxu0 0.0
    %221 = vmatprep.subr.mxu0 0.0
    %222 = vmatpush2.msra.mxu0 0.0
    %223 = vmatprep.subr.mxu0 0.0
    %224 = vmatpush2.msra.mxu0 0.0
    %225 = vmatprep.subr.mxu0 0.0
    %226 = vmatpush2.msra.mxu0 0.0
    %227 = vmatprep.subr.mxu0 0.0
    %228 = vmatpush2.msra.mxu0 0.0
    %229 = vmatprep.subr.mxu0 0.0
    %230 = vmatpush2.msra.mxu0 0.0
    %231 = vmatprep.subr.mxu0 0.0
    %232 = vmatpush2.msra.mxu0 0.0
    %233 = vmatprep.subr.mxu0 0.0
    %234 = vmatpush2.msra.mxu0 0.0
    %235 = vmatprep.subr.mxu0 0.0
    %236 = vmatpush2.msra.mxu0 0.0
    %237 = vmatprep.subr.mxu0 0.0
    %238 = vmatpush2.msra.mxu0 0.0
    %239 = vmatprep.subr.mxu0 0.0
    %240 = vmatpush2.msra.mxu0 0.0
    %241 = vmatprep.subr.mxu0 0.0
    %242 = vmatpush2.msra.mxu0 0.0
    %243 = vmatprep.subr.mxu0 0.0
    %244 = vmatpush2.msra.mxu0 0.0
    %245 = vmatprep.subr.mxu0 0.0
    %246 = vmatpush2.msra.mxu0 0.0
    %247 = vmatprep.subr.mxu0 0.0
    %248 = vmatpush2.msra.mxu0 0.0
    %249 = vmatprep.subr.mxu0 0.0
    %250 = vmatpush2.msra.mxu0 0.0
    %251 = vmatprep.mubr.f32.mxu0 0.0
    %252 = vmatmul.mubr.f32.gmra.mxu0 %v162
    %v253 = vpop.f32.mrf.mxu0
    %v254 = vadd.f32 %v185, %v253
    %v255 = vpop.f32.mrf.mxu0
    %256 = vmatprep.mubr.f32.mxu0 0.0
    %257 = vmatmul.mubr.f32.gmra.mxu0 %v163
    %v258 = vpop.f32.mrf.mxu0
    %v259 = vadd.f32 %v185, %v258
    %v260 = vpop.f32.mrf.mxu0
    %261 = vdwg.mxu0
    %v262 = vmax.f32 %v254, 0.0
    %v263 = vmax.f32 %v259, 0.0
    %264 = vst [vmem:[#allocation8] sm:$0xff] %v262
    %265 = vst [vmem:[#allocation8 + $0x8] sm:$0xff] %v263
    // Predicated region
    $region34: #{tpu_custom_call.1} parent=1 // pred_check
      _
    $region35: #{tpu_custom_call.1} parent=1 // pred_check_branch
      %267 = sbr.rel (0) target = $region37
    $region36: #{tpu_custom_call.1} parent=1 // pred_region
      %s269 = ssub.s32 256, 256
      %270 = vsyncadd [#allocation4], %s269
      %s271 = sshll.u32 [#allocation8], 4
      %s272 = int_to_ptr.vmem [resolvable:$true] %s271
      %277 = dma.vmem_to_hbm [thread:$0]  %s272, 256, %s5, [#allocation4], 128, 128, 8
    $region37: #{tpu_custom_call.1} parent=1 // pred_fallthru
      _
    // Predicated region
    $region38: #{tpu_custom_call.1} parent=1 // pred_check
      _
    $region39: #{tpu_custom_call.1} parent=1 // pred_check_branch
      %279 = sbr.rel (0) target = $region41
    $region40: #{tpu_custom_call.1} parent=1 // pred_region
      %280 = dma.done [#allocation4], 256
    $region41: #{tpu_custom_call.1} parent=1 // pred_fallthru
      _
    %281 = vsyncpa [#allocation3], 1
    %282 = vsyncpa [#allocation6], 1
    %283 = vsyncpa [#allocation4], 1

</llo_original>
